<compile_context>
chip_gen: v7x
topology: tpu7x:2x2x1
jax: 0.10.0
libtpu: 0.0.40
codegen_flags: <defaults>
</compile_context>

<pallas_src>
import functools

import jax
import jax.numpy as jnp
from jax import lax
from jax.experimental import pallas as pl
from jax.experimental.pallas import tpu as pltpu

_LANE = 128


# ----------------------------------------------------------------------------- kernel
def _masked_refinement_kernel(pred_ref, idx_ref, w_ref, out_ref,
                              m_sc, l_sc, p_sc, acc_sc, *, c_chunk, upcast):
    # pred_ref : (1, B, cc, Tt)  logits block (classes on sublanes, time on lanes)
    # idx_ref  : (1, B, Tt)      int32 gold class per (batch, time)
    # w_ref    : (B, Tt)         f32 weights (0 at padded / invalid frames)
    # out_ref  : (1, 1, Tt)      per-time-tile loss row (written once per tile)
    # scratch  : (B, Tt) f32     running max / exp-sum / gold-logit / sum_k ce
    k = pl.program_id(1)
    c = pl.program_id(2)
    nk = pl.num_programs(1)
    nc = pl.num_programs(2)

    @pl.when((k == 0) & (c == 0))
    def _():
        acc_sc[...] = jnp.zeros_like(acc_sc)

    @pl.when(c == 0)
    def _():
        m_sc[...] = jnp.full_like(m_sc, -jnp.inf)
        l_sc[...] = jnp.zeros_like(l_sc)
        p_sc[...] = jnp.zeros_like(p_sc)

    logits = pred_ref[0]                                    # (B, cc, Tt)
    if upcast:
        logits = logits.astype(jnp.float32)

    # Online log-sum-exp over the class axis (chunked by the grid).
    chunk_max = jnp.max(logits, axis=1).astype(jnp.float32)          # (B, Tt)
    m_prev = m_sc[...]
    m_new = jnp.maximum(m_prev, chunk_max)
    e = jnp.exp(logits - m_new[:, None, :].astype(logits.dtype))     # exp in input dtype (EUP)
    chunk_sum = jnp.sum(e, axis=1, dtype=jnp.float32)                # f32 accumulation
    l_sc[...] = l_sc[...] * jnp.exp(m_prev - m_new) + chunk_sum
    m_sc[...] = m_new

    # Gold-class logit pick: classes in this chunk live in [c*cc, (c+1)*cc).
    idx = idx_ref[0]                                                  # (B, Tt) int32
    cls = c * c_chunk + lax.broadcasted_iota(jnp.int32, (1, c_chunk, 1), 1)
    hit = cls == idx[:, None, :]                                      # (B, cc, Tt)
    p_sc[...] += jnp.sum(jnp.where(hit, logits, 0), axis=1, dtype=jnp.float32)

    @pl.when(c == nc - 1)
    def _():
        # ce = logsumexp - gold_logit, accumulated over codebooks k.
        acc_sc[...] += jnp.log(l_sc[...]) + m_sc[...] - p_sc[...]

    @pl.when((k == nk - 1) & (c == nc - 1))
    def _():
        out_ref[...] = jnp.sum(acc_sc[...] * w_ref[...], axis=0, keepdims=True)[None]


# ----------------------------------------------------------------------------- planning
def _round_up(x, m):
    return ((x + m - 1) // m) * m


def _vmem_plan():
    try:
        kind = jax.devices()[0].device_kind.lower()
    except Exception:  # pragma: no cover - defensive
        kind = ""
    if "v5 lite" in kind or "v5e" in kind or "v5litepod" in kind:
        # 128 MiB physical, 16 MiB default scoped limit -> raise it explicitly.
        return dict(budget=48 << 20, limit=64 << 20, min_t_tiles=1, f32_compute=True)
    if "v6" in kind:
        # 128 MiB physical: allow big time tiles (fewer grid steps, >85% HBM roofline).
        return dict(budget=64 << 20, limit=96 << 20, min_t_tiles=1, f32_compute=False)
    if "v7" in kind:
        # 64 MiB physical per TC, 2 TCs per chip -> keep >=2 time tiles for megacore.
        return dict(budget=24 << 20, limit=40 << 20, min_t_tiles=2, f32_compute=False)
    # Unknown / older chip: conservative budget, f32 element-wise math.
    return dict(budget=20 << 20, limit=32 << 20, min_t_tiles=1, f32_compute=True)


def _vmem_footprint(B, cc, tt, itemsize, upcast):
    """Temp-aware VMEM estimate for one in-flight grid step (bytes)."""
    chunk = B * cc * tt
    bt = B * tt
    comp_bytes = 12 if (upcast or itemsize == 4) else 8   # f32 copy/exp/select vs bf16 temps
    pred = 2 * chunk * itemsize                           # double-buffered input block
    temps = chunk * comp_bytes                            # in-kernel full-chunk temporaries
    state = 4 * bt * 4                                    # m / l / p / acc f32 scratch
    io = 2 * (bt * 4 + bt * 4) + 2 * tt * 4               # idx + weights (x2) + out block
    return pred + temps + state + io


def _choose_c_chunk(C, itemsize, override=None):
    if override is not None:
        assert C % override == 0, "c_chunk override must divide C"
        return override
    if C <= 512:
        return C                        # single chunk; full-dim block is always legal
    align = 16 if itemsize == 2 else 8  # sublane packing (bf16 packs 16 rows / vreg)
    for cand in (512, 384, 256, 128, 64, 32, 16, 8):
        if cand % align == 0 and C % cand == 0:
            return cand
    return C                            # no aligned divisor: fall back to full C


def _choose_t_tile(t_pad, footprint_fn, budget, min_t_tiles):
    if t_pad < 2 * _LANE:
        return t_pad                    # tiny time axis: full dim (allowed by the rule)
    divisors = [d for d in range(_LANE, t_pad + 1, _LANE) if t_pad % d == 0]
    max_tile = t_pad // min_t_tiles if (t_pad // _LANE) >= min_t_tiles else t_pad
    best = _LANE
    for d in divisors:
        if d <= max_tile and footprint_fn(d) <= budget:
            best = max(best, d)
    return best


# ----------------------------------------------------------------------------- wrappers
def masked_refinement_objective_from_indices(predicted_logits, gold_idx, non_pad_mask,
                                             *, c_chunk=None):
    """predicted_logits: [K,B,C,T]; gold_idx: [B,K,T] int32; non_pad_mask: [B,T_mask] bool."""
    K, B, C, T = predicted_logits.shape
    assert gold_idx.shape == (B, K, T)
    t_mask = non_pad_mask.shape[1]
    assert non_pad_mask.shape[0] == B and t_mask <= T

    plan = _vmem_plan()
    itemsize = jnp.dtype(predicted_logits.dtype).itemsize
    upcast = plan["f32_compute"] or itemsize == 4
    cc = _choose_c_chunk(C, itemsize, c_chunk)

    # Per-frame weights: mask / valid_frames_b / (B*C); 0 at invalid / padded frames.
    # All-padded rows are clamped (contribute 0) instead of dividing by zero.
    mask = jnp.pad(non_pad_mask.astype(jnp.float32), ((0, 0), (0, T - t_mask)))
    denom = jnp.maximum(jnp.sum(mask, axis=1, keepdims=True), 1.0)
    weights = mask / denom / float(B * C)

    gold_idx = jnp.transpose(gold_idx.astype(jnp.int32), (1, 0, 2))       # (K, B, T)

    # Lane-dense time padding (zero logits + zero weights => no contribution).
    t_pad = T if (T < _LANE or T % _LANE == 0) else _round_up(T, _LANE)
    pred = predicted_logits
    if t_pad != T:
        dt = t_pad - T
        pred = jnp.pad(pred, ((0, 0), (0, 0), (0, 0), (0, dt)))
        gold_idx = jnp.pad(gold_idx, ((0, 0), (0, 0), (0, dt)))
        weights = jnp.pad(weights, ((0, 0), (0, dt)))

    footprint_fn = lambda tt: _vmem_footprint(B, cc, tt, itemsize, upcast)
    t_tile = _choose_t_tile(t_pad, footprint_fn, plan["budget"], plan["min_t_tiles"])
    num_t = t_pad // t_tile
    num_c = C // cc
    vmem_limit = int(min(plan["limit"], max(32 << 20, 2 * footprint_fn(t_tile))))

    kernel = functools.partial(_masked_refinement_kernel, c_chunk=cc, upcast=upcast)

    out = pl.pallas_call(
        kernel,
        out_shape=jax.ShapeDtypeStruct((num_t, 1, t_tile), jnp.float32),
        grid_spec=pltpu.PrefetchScalarGridSpec(
            num_scalar_prefetch=0,
            grid=(num_t, K, num_c),                       # reductions (K, class-chunk) last
            in_specs=[
                pl.BlockSpec((1, B, cc, t_tile), lambda t, k, c: (k, 0, c, t)),
                pl.BlockSpec((1, B, t_tile), lambda t, k, c: (k, 0, t)),
                pl.BlockSpec((B, t_tile), lambda t, k, c: (0, t)),
            ],
            out_specs=pl.BlockSpec((1, 1, t_tile), lambda t, k, c: (t, 0, 0)),
            scratch_shapes=[pltpu.VMEM((B, t_tile), jnp.float32)] * 4,
        ),
        compiler_params=pltpu.CompilerParams(
            dimension_semantics=("parallel", "arbitrary", "arbitrary"),
            vmem_limit_bytes=vmem_limit),
    )(pred, gold_idx, weights)

    # TODO(synk): forward-only kernel — training gradients need a custom_vjp / backward kernel.
    loss = jnp.sum(out)
    return loss, loss


def masked_refinement_objective(predicted_one_hot, gold_one_hot, non_pad_mask, **kw):
    """Module-compatible entry: pred [K,B,C,T] logits, gold [B,K,T,C] one-hot, mask [B,T_mask]."""
    K, B, C, T = predicted_one_hot.shape
    assert gold_one_hot.shape == (B, K, T, C)
    # TODO(synk): in production pass gold class indices directly
    # (masked_refinement_objective_from_indices) and skip this full-HBM argmax pass.
    gold_idx = jnp.argmax(gold_one_hot, axis=-1).astype(jnp.int32)          # (B, K, T)
    return masked_refinement_objective_from_indices(predicted_one_hot, gold_idx,
                                                    non_pad_mask, **kw)


# ----------------------------------------------------------------------------- reference & test
def _reference(predicted_logits, gold_idx, non_pad_mask):
    K, B, C, T = predicted_logits.shape
    logp = jax.nn.log_softmax(predicted_logits.astype(jnp.float32), axis=2)   # [K,B,C,T]
    gold = jnp.transpose(gold_idx, (1, 0, 2))                                 # [K,B,T]
    ce = -jnp.take_along_axis(logp, gold[:, :, None, :], axis=2)[:, :, 0, :]  # [K,B,T]
    cls = jnp.sum(ce, axis=0)                                                 # [B,T]
    t_mask = non_pad_mask.shape[1]
    mask = jnp.pad(non_pad_mask.astype(jnp.float32), ((0, 0), (0, T - t_mask)))
    w = mask / jnp.sum(mask, axis=1, keepdims=True) / (B * C)
    return jnp.sum(cls * w * mask)


if __name__ == "__main__":
    key = jax.random.PRNGKey(0)

    # --- Test 1: f32 logits, small shapes (module-style one-hot entry point) ---
    K, B, C, T, T_mask = 4, 2, 32, 8, 6
    k1, k2 = jax.random.split(key)
    pred = jax.random.normal(k1, (K, B, C, T), dtype=jnp.float32)
    gold_idx = jax.random.randint(k2, (B, K, T), 0, C, dtype=jnp.int32)
    gold_one_hot = jax.nn.one_hot(gold_idx, C, dtype=jnp.float32)             # [B,K,T,C]
    lengths = jnp.array([6, 4], dtype=jnp.int32)
    non_pad_mask = jnp.arange(T_mask)[None, :] < lengths[:, None]             # [B,T_mask]

    loss, loss_again = masked_refinement_objective(pred, gold_one_hot, non_pad_mask)
    jax.block_until_ready(loss)
    ref = _reference(pred, gold_idx, non_pad_mask)
    assert jnp.allclose(loss, ref, rtol=1e-5, atol=1e-6), (loss, ref)
    assert jnp.allclose(loss, loss_again)

    # --- Test 2: bf16 logits, chunked class reduction + multi-tile time axis ---
    K2, B2, C2, T2, T_mask2 = 2, 2, 64, 256, 200
    k3, k4 = jax.random.split(k2)
    pred2 = jax.random.normal(k3, (K2, B2, C2, T2), dtype=jnp.float32)
    gold_idx2 = jax.random.randint(k4, (B2, K2, T2), 0, C2, dtype=jnp.int32)
    lengths2 = jnp.array([200, 150], dtype=jnp.int32)
    mask2 = jnp.arange(T_mask2)[None, :] < lengths2[:, None]

    loss_bf16, _ = masked_refinement_objective_from_indices(
        pred2.astype(jnp.bfloat16), gold_idx2, mask2, c_chunk=32)
    jax.block_until_ready(loss_bf16)
    ref2 = _reference(pred2.astype(jnp.bfloat16).astype(jnp.float32), gold_idx2, mask2)
    assert jnp.allclose(loss_bf16, ref2, rtol=3e-2, atol=5e-3), (loss_bf16, ref2)

    print("KERNEL_OK")
</pallas_src>

<mosaic_0001>
module attributes {stable_mosaic.version = 11 : i64} {
  func.func @_masked_refinement_kernel(%arg0: i32, %arg1: i32, %arg2: i32, %arg3: memref<1x2x32x8xf32, #tpu.memory_space<vmem>>, %arg4: memref<1x2x8xi32, #tpu.memory_space<vmem>>, %arg5: memref<2x8xf32, #tpu.memory_space<vmem>>, %arg6: memref<1x1x8xf32, #tpu.memory_space<vmem>>, %arg7: memref<2x8xf32, #tpu.memory_space<vmem>>, %arg8: memref<2x8xf32, #tpu.memory_space<vmem>>, %arg9: memref<2x8xf32, #tpu.memory_space<vmem>>, %arg10: memref<2x8xf32, #tpu.memory_space<vmem>>) attributes {dimension_semantics = [#tpu.dimension_semantics<parallel>, #tpu.dimension_semantics<arbitrary>, #tpu.dimension_semantics<arbitrary>], iteration_bounds = array<i64: 1, 4, 1>, scalar_prefetch = 0 : i64, scratch_operands = 4 : i64, tpu.core_type = #tpu.core_type<tc>, window_params = [{transform_indices = @transform_0, window_bounds = array<i64: 1, 2, 32, 8>}, {transform_indices = @transform_1, window_bounds = array<i64: 1, 2, 8>}, {transform_indices = @transform_2, window_bounds = array<i64: 2, 8>}, {transform_indices = @transform_3, window_bounds = array<i64: 1, 1, 8>}]} {
    %c0_i32 = arith.constant 0 : i32
    %0 = arith.cmpi eq, %arg1, %c0_i32 : i32
    %c0_i32_0 = arith.constant 0 : i32
    %1 = arith.cmpi eq, %arg2, %c0_i32_0 : i32
    %2 = arith.andi %0, %1 : i1
    %3 = arith.extui %2 : i1 to i32
    %c0_i32_1 = arith.constant 0 : i32
    %4 = arith.cmpi ne, %3, %c0_i32_1 : i32
    scf.if %4 {
      %cst_29 = arith.constant 0.000000e+00 : f32
      %50 = vector.broadcast %cst_29 : f32 to vector<2x8xf32>
      %c0_30 = arith.constant 0 : index
      %c0_31 = arith.constant 0 : index
      %51 = vector.load %arg10[%c0_30, %c0_31] : memref<2x8xf32, #tpu.memory_space<vmem>>, vector<2x8xf32>
      tpu.vector_store %arg10[%c0_30, %c0_31], %50 {strides = array<i32>} : memref<2x8xf32, #tpu.memory_space<vmem>>, vector<2x8xf32>,
    } else {
    }
    %c0_i32_2 = arith.constant 0 : i32
    %5 = arith.cmpi eq, %arg2, %c0_i32_2 : i32
    %6 = arith.extui %5 : i1 to i32
    %c0_i32_3 = arith.constant 0 : i32
    %7 = arith.cmpi ne, %6, %c0_i32_3 : i32
    scf.if %7 {
      %cst_29 = arith.constant 0xFF800000 : f32
      %50 = vector.broadcast %cst_29 : f32 to vector<2x8xf32>
      %c0_30 = arith.constant 0 : index
      %c0_31 = arith.constant 0 : index
      %51 = vector.load %arg7[%c0_30, %c0_31] : memref<2x8xf32, #tpu.memory_space<vmem>>, vector<2x8xf32>
      tpu.vector_store %arg7[%c0_30, %c0_31], %50 {strides = array<i32>} : memref<2x8xf32, #tpu.memory_space<vmem>>, vector<2x8xf32>,
      %cst_32 = arith.constant 0.000000e+00 : f32
      %52 = vector.broadcast %cst_32 : f32 to vector<2x8xf32>
      %c0_33 = arith.constant 0 : index
      %c0_34 = arith.constant 0 : index
      %53 = vector.load %arg8[%c0_33, %c0_34] : memref<2x8xf32, #tpu.memory_space<vmem>>, vector<2x8xf32>
      tpu.vector_store %arg8[%c0_33, %c0_34], %52 {strides = array<i32>} : memref<2x8xf32, #tpu.memory_space<vmem>>, vector<2x8xf32>,
      %cst_35 = arith.constant 0.000000e+00 : f32
      %54 = vector.broadcast %cst_35 : f32 to vector<2x8xf32>
      %c0_36 = arith.constant 0 : index
      %c0_37 = arith.constant 0 : index
      %55 = vector.load %arg9[%c0_36, %c0_37] : memref<2x8xf32, #tpu.memory_space<vmem>>, vector<2x8xf32>
      tpu.vector_store %arg9[%c0_36, %c0_37], %54 {strides = array<i32>} : memref<2x8xf32, #tpu.memory_space<vmem>>, vector<2x8xf32>,
    } else {
    }
    %c0 = arith.constant 0 : index
    %c0_4 = arith.constant 0 : index
    %c0_5 = arith.constant 0 : index
    %c0_6 = arith.constant 0 : index
    %8 = vector.load %arg3[%c0, %c0_4, %c0_5, %c0_6] : memref<1x2x32x8xf32, #tpu.memory_space<vmem>>, vector<1x2x32x8xf32>
    %9 = vector.shape_cast %8 : vector<1x2x32x8xf32> to vector<2x32x8xf32>
    %cst = arith.constant dense<0xFF800000> : vector<2x8xf32>
    %10 = vector.multi_reduction <maximumf>, %9, %cst [1] : vector<2x32x8xf32> to vector<2x8xf32>
    %c0_7 = arith.constant 0 : index
    %c0_8 = arith.constant 0 : index
    %11 = vector.load %arg7[%c0_7, %c0_8] : memref<2x8xf32, #tpu.memory_space<vmem>>, vector<2x8xf32>
    %12 = arith.maximumf %11, %10 : vector<2x8xf32>
    %13 = vector.shape_cast %12 : vector<2x8xf32> to vector<2x1x8xf32>
    %14 = vector.broadcast %13 : vector<2x1x8xf32> to vector<2x32x8xf32>
    %15 = arith.subf %9, %14 : vector<2x32x8xf32>
    %16 = math.exp %15 : vector<2x32x8xf32>
    %cst_9 = arith.constant dense<0.000000e+00> : vector<2x8xf32>
    %17 = vector.multi_reduction <add>, %16, %cst_9 [1] : vector<2x32x8xf32> to vector<2x8xf32>
    %c0_10 = arith.constant 0 : index
    %c0_11 = arith.constant 0 : index
    %18 = vector.load %arg8[%c0_10, %c0_11] : memref<2x8xf32, #tpu.memory_space<vmem>>, vector<2x8xf32>
    %19 = arith.subf %11, %12 : vector<2x8xf32>
    %20 = math.exp %19 : vector<2x8xf32>
    %21 = arith.mulf %18, %20 : vector<2x8xf32>
    %22 = arith.addf %21, %17 : vector<2x8xf32>
    %c0_12 = arith.constant 0 : index
    %c0_13 = arith.constant 0 : index
    %23 = vector.load %arg8[%c0_12, %c0_13] : memref<2x8xf32, #tpu.memory_space<vmem>>, vector<2x8xf32>
    tpu.vector_store %arg8[%c0_12, %c0_13], %22 {strides = array<i32>} : memref<2x8xf32, #tpu.memory_space<vmem>>, vector<2x8xf32>,
    %c0_14 = arith.constant 0 : index
    %c0_15 = arith.constant 0 : index
    %24 = vector.load %arg7[%c0_14, %c0_15] : memref<2x8xf32, #tpu.memory_space<vmem>>, vector<2x8xf32>
    tpu.vector_store %arg7[%c0_14, %c0_15], %12 {strides = array<i32>} : memref<2x8xf32, #tpu.memory_space<vmem>>, vector<2x8xf32>,
    %c0_16 = arith.constant 0 : index
    %c0_17 = arith.constant 0 : index
    %c0_18 = arith.constant 0 : index
    %25 = vector.load %arg4[%c0_16, %c0_17, %c0_18] : memref<1x2x8xi32, #tpu.memory_space<vmem>>, vector<1x2x8xi32>
    %26 = vector.shape_cast %25 : vector<1x2x8xi32> to vector<2x8xi32>
    %c32_i32 = arith.constant 32 : i32
    %27 = arith.muli %arg2, %c32_i32 : i32
    %28 = tpu.iota {dimensions = array<i32: 1>} : vector<1x32x1xi32>
    %29 = vector.broadcast %27 : i32 to vector<1x32x1xi32>
    %30 = arith.addi %29, %28 : vector<1x32x1xi32>
    %31 = vector.shape_cast %26 : vector<2x8xi32> to vector<2x1x8xi32>
    %32 = vector.broadcast %30 : vector<1x32x1xi32> to vector<2x32x8xi32>
    %33 = vector.broadcast %31 : vector<2x1x8xi32> to vector<2x32x8xi32>
    %34 = arith.cmpi eq, %32, %33 : vector<2x32x8xi32>
    %c0_19 = arith.constant 0 : index
    %c0_20 = arith.constant 0 : index
    %35 = vector.load %arg9[%c0_19, %c0_20] : memref<2x8xf32, #tpu.memory_space<vmem>>, vector<2x8xf32>
    %c0_i32_21 = arith.constant 0 : i32
    %36 = arith.sitofp %c0_i32_21 : i32 to f32
    %37 = vector.broadcast %36 : f32 to vector<2x32x8xf32>
    %38 = arith.select %34, %9, %37 : vector<2x32x8xi1>, vector<2x32x8xf32>
    %cst_22 = arith.constant dense<0.000000e+00> : vector<2x8xf32>
    %39 = vector.multi_reduction <add>, %38, %cst_22 [1] : vector<2x32x8xf32> to vector<2x8xf32>
    %40 = arith.addf %35, %39 : vector<2x8xf32>
    %c0_23 = arith.constant 0 : index
    %c0_24 = arith.constant 0 : index
    %41 = vector.load %arg9[%c0_23, %c0_24] : memref<2x8xf32, #tpu.memory_space<vmem>>, vector<2x8xf32>
    tpu.vector_store %arg9[%c0_23, %c0_24], %40 {strides = array<i32>} : memref<2x8xf32, #tpu.memory_space<vmem>>, vector<2x8xf32>,
    %c0_i32_25 = arith.constant 0 : i32
    %42 = arith.cmpi eq, %arg2, %c0_i32_25 : i32
    %43 = arith.extui %42 : i1 to i32
    %c0_i32_26 = arith.constant 0 : i32
    %44 = arith.cmpi ne, %43, %c0_i32_26 : i32
    scf.if %44 {
      %c0_29 = arith.constant 0 : index
      %c0_30 = arith.constant 0 : index
      %50 = vector.load %arg10[%c0_29, %c0_30] : memref<2x8xf32, #tpu.memory_space<vmem>>, vector<2x8xf32>
      %c0_31 = arith.constant 0 : index
      %c0_32 = arith.constant 0 : index
      %51 = vector.load %arg8[%c0_31, %c0_32] : memref<2x8xf32, #tpu.memory_space<vmem>>, vector<2x8xf32>
      %52 = math.log %51 : vector<2x8xf32>
      %c0_33 = arith.constant 0 : index
      %c0_34 = arith.constant 0 : index
      %53 = vector.load %arg7[%c0_33, %c0_34] : memref<2x8xf32, #tpu.memory_space<vmem>>, vector<2x8xf32>
      %54 = arith.addf %52, %53 : vector<2x8xf32>
      %c0_35 = arith.constant 0 : index
      %c0_36 = arith.constant 0 : index
      %55 = vector.load %arg9[%c0_35, %c0_36] : memref<2x8xf32, #tpu.memory_space<vmem>>, vector<2x8xf32>
      %56 = arith.subf %54, %55 : vector<2x8xf32>
      %57 = arith.addf %50, %56 : vector<2x8xf32>
      %c0_37 = arith.constant 0 : index
      %c0_38 = arith.constant 0 : index
      %58 = vector.load %arg10[%c0_37, %c0_38] : memref<2x8xf32, #tpu.memory_space<vmem>>, vector<2x8xf32>
      tpu.vector_store %arg10[%c0_37, %c0_38], %57 {strides = array<i32>} : memref<2x8xf32, #tpu.memory_space<vmem>>, vector<2x8xf32>,
    } else {
    }
    %c3_i32 = arith.constant 3 : i32
    %45 = arith.cmpi eq, %arg1, %c3_i32 : i32
    %c0_i32_27 = arith.constant 0 : i32
    %46 = arith.cmpi eq, %arg2, %c0_i32_27 : i32
    %47 = arith.andi %45, %46 : i1
    %48 = arith.extui %47 : i1 to i32
    %c0_i32_28 = arith.constant 0 : i32
    %49 = arith.cmpi ne, %48, %c0_i32_28 : i32
    scf.if %49 {
      %c0_29 = arith.constant 0 : index
      %c0_30 = arith.constant 0 : index
      %50 = vector.load %arg10[%c0_29, %c0_30] : memref<2x8xf32, #tpu.memory_space<vmem>>, vector<2x8xf32>
      %c0_31 = arith.constant 0 : index
      %c0_32 = arith.constant 0 : index
      %51 = vector.load %arg5[%c0_31, %c0_32] : memref<2x8xf32, #tpu.memory_space<vmem>>, vector<2x8xf32>
      %52 = arith.mulf %50, %51 : vector<2x8xf32>
      %cst_33 = arith.constant dense<0.000000e+00> : vector<8xf32>
      %53 = vector.multi_reduction <add>, %52, %cst_33 [0] : vector<2x8xf32> to vector<8xf32>
      %54 = vector.shape_cast %53 : vector<8xf32> to vector<1x8xf32>
      %55 = vector.shape_cast %54 : vector<1x8xf32> to vector<1x1x8xf32>
      %c0_34 = arith.constant 0 : index
      %c0_35 = arith.constant 0 : index
      %c0_36 = arith.constant 0 : index
      %56 = vector.load %arg6[%c0_34, %c0_35, %c0_36] : memref<1x1x8xf32, #tpu.memory_space<vmem>>, vector<1x1x8xf32>
      tpu.vector_store %arg6[%c0_34, %c0_35, %c0_36], %55 {strides = array<i32>} : memref<1x1x8xf32, #tpu.memory_space<vmem>>, vector<1x1x8xf32>,
    } else {
    }
    return
  }
  func.func @transform_0(%arg0: i32, %arg1: i32, %arg2: i32) -> (i32, i32, i32, i32) {
    %c0_i32 = arith.constant 0 : i32
    %c0_i32_0 = arith.constant 0 : i32
    return %arg1, %c0_i32, %arg2, %arg0 : i32, i32, i32, i32
  }
  func.func @transform_1(%arg0: i32, %arg1: i32, %arg2: i32) -> (i32, i32, i32) {
    %c0_i32 = arith.constant 0 : i32
    %c0_i32_0 = arith.constant 0 : i32
    return %arg1, %c0_i32, %arg0 : i32, i32, i32
  }
  func.func @transform_2(%arg0: i32, %arg1: i32, %arg2: i32) -> (i32, i32) {
    %c0_i32 = arith.constant 0 : i32
    %c0_i32_0 = arith.constant 0 : i32
    return %c0_i32, %arg0 : i32, i32
  }
  func.func @transform_3(%arg0: i32, %arg1: i32, %arg2: i32) -> (i32, i32, i32) {
    %c0_i32 = arith.constant 0 : i32
    %c0_i32_0 = arith.constant 0 : i32
    %c0_i32_1 = arith.constant 0 : i32
    return %arg0, %c0_i32, %c0_i32_0 : i32, i32, i32
  }
}

</mosaic_0001>

<llo_original>
// kernel: tpu_custom_call.1
$region0: #{tpu_custom_call.1}
  #allocation0 [shape = 'u32[]', space=smem, size = 0x4, offset = 0x4, fixed_abs, tag = 'smem constant byte address 0x4 - core index']
  #allocation1 [shape = 'u32[144,128]{1,0:T(1,128)}', space=vmem, size = 0x12000, scoped, tag = 'internal scratch']
  #allocation2 [shape = 'f32[2,8]{1,0:T(2,128)}', space=vmem, size = 0x400, scoped, tag = 'scratch operand']
  #allocation3 [shape = 'f32[2,8]{1,0:T(2,128)}', space=vmem, size = 0x400, scoped, tag = 'scratch operand']
  #allocation4 [shape = 'f32[2,8]{1,0:T(2,128)}', space=vmem, size = 0x400, scoped, tag = 'scratch operand']
  #allocation5 [shape = 'f32[2,8]{1,0:T(2,128)}', space=vmem, size = 0x400, scoped, tag = 'scratch operand']
  %s0 = inlined_call_operand.vmem [shape: f32[4,2,32,8], index: 0, kind: input, shape index: {}]
  %s1 = inlined_call_operand.vmem [shape: s32[4,2,8], index: 1, kind: input, shape index: {}]
  %s2 = inlined_call_operand.vmem [shape: f32[2,8], index: 2, kind: input, shape index: {}]
  %s3 = inlined_call_operand.hbm [shape: f32[1,1,8], index: 3, kind: output, shape index: {}]
  %s4 = sld [smem:[#allocation0]]
  $region61: #{tpu_custom_call.1} parent=0
    _
  %s6 = ssub.s32 1, %s4
  %s7 = scalar_select 0, %s6, %s4
  $region1: #{tpu_custom_call.1} parent=0
    #allocation6 [shape = 'u8[512]{0}', space=vmem, size = 0x400, scoped, tag = 'output window, operand 0, single buffered']
    #allocation7 [shape = 's32[2]{0}', space=sflag, size = 0x8, scoped, tag = 'scoped memory for tpu_custom_call.1']
    %8 = vsyncpa [#allocation7], 0
    loop: start=0, step=1, limit=6
    $region2: #{tpu_custom_call.1} parent=1 // loop_pre_header
      _
    $region3: #{tpu_custom_call.1} parent=1 // loop_header
      %s10 = sphi 0, %s14
      %p11 = scmp.ge.s32.totalorder %s10, 6
      %s17 = sphi 0, %s36
      %s18 = sphi 0, %s32
      %s19 = sphi 0, %s28
      %s20 = sphi 0, %s17
      %s21 = sphi 0, %s18
      %s22 = sphi 0, %s19
      %s23 = sphi 0, %s20
      %s24 = sphi 0, %s21
      %s25 = sphi 0, %s22
      %s43 = sphi 0, %s45
      %s46 = sphi 0, %s43
      %s47 = sphi 0, %s46
      %s63 = sphi 0, %s47
      %s71 = sphi 0, %s73
      %s74 = sphi 0, %s71
      %s75 = sphi 0, %s74
      %s91 = sphi 0, %s75
      %s97 = sphi 0, %s99
      %s100 = sphi 0, %s97
      %s101 = sphi 0, %s100
      %s117 = sphi 0, %s101
      %s123 = sphi 0, %s125
      %s126 = sphi 0, %s123
      %s127 = sphi 0, %s126
      %s143 = sphi 0, %s127
    $region4: #{tpu_custom_call.1} parent=1 // loop_header_branch
      %13 = sbr.rel (%p11) target = $region8
    $region5: #{tpu_custom_call.1} parent=1 // loop_body
      %s15 = ssub.s32 %s10, 1
      %s16 = ssub.s32 %s10, 2
      %s26 = sadd.s32 1, %s19
      %p27 = scmp.ge.s32.totalorder %s26, 1
      %s28 = scalar_select %p27, 0, %s26
      %s29 = sadd.s32 1, %s18
      %s30 = scalar_select %p27, %s29, %s18
      %p31 = scmp.ge.s32.totalorder %s30, 4
      %s32 = scalar_select %p31, 0, %s30
      %s33 = sadd.s32 1, %s17
      %s34 = scalar_select %p31, %s33, %s17
      %p35 = scmp.ge.s32.totalorder %s34, 1
      %s36 = scalar_select %p35, 0, %s34
      %s37 = ssub.s32 %s18, %s32
      %s38 = ssub.s32 %s19, %s28
      %s39 = sor.u32 %s37, %s38
      %s40 = ssub.s32 %s17, %s36
      %s41 = sor.u32 %s39, %s40
      %p42 = scmp.eq.s32.totalorder %s41, 0
      %s44 = sadd.s32 %s43, 1
      %s45 = scalar_select %p42, %s43, %s44
      %p48 = pneg %p42
      %p49 = scmp.eq.s32.totalorder %s10, 3
      %p50 = por %p48, %p49
      %p51 = scmp.ne.s32.totalorder %s43, %s46
      %p52 = scmp.eq.s32.totalorder %s10, 0
      %p53 = por %p51, %p52
      %p54 = scmp.ne.s32.totalorder %s43, %s46
      %p55 = scmp.eq.s32.totalorder %s15, 3
      %p56 = por %p54, %p55
      %p57 = scmp.ne.s32.totalorder %s46, %s47
      %p58 = scmp.eq.s32.totalorder %s15, 0
      %p59 = por %p57, %p58
      %p60 = scmp.ne.s32.totalorder %s46, %s47
      %p61 = scmp.eq.s32.totalorder %s16, 3
      %p62 = por %p60, %p61
      %p64 = scmp.ne.s32.totalorder %s47, %s63
      %p65 = scmp.eq.s32.totalorder %s16, 0
      %p66 = por %p64, %p65
      %s67 = ssub.s32 %s18, %s32
      %s68 = ssub.s32 %s17, %s36
      %s69 = sor.u32 %s67, %s68
      %p70 = scmp.eq.s32.totalorder %s69, 0
      %s72 = sadd.s32 %s71, 1
      %s73 = scalar_select %p70, %s71, %s72
      %p76 = pneg %p70
      %p77 = scmp.eq.s32.totalorder %s10, 3
      %p78 = por %p76, %p77
      %p79 = scmp.ne.s32.totalorder %s71, %s74
      %p80 = scmp.eq.s32.totalorder %s10, 0
      %p81 = por %p79, %p80
      %p82 = scmp.ne.s32.totalorder %s71, %s74
      %p83 = scmp.eq.s32.totalorder %s15, 3
      %p84 = por %p82, %p83
      %p85 = scmp.ne.s32.totalorder %s74, %s75
      %p86 = scmp.eq.s32.totalorder %s15, 0
      %p87 = por %p85, %p86
      %p88 = scmp.ne.s32.totalorder %s74, %s75
      %p89 = scmp.eq.s32.totalorder %s16, 3
      %p90 = por %p88, %p89
      %p92 = scmp.ne.s32.totalorder %s75, %s91
      %p93 = scmp.eq.s32.totalorder %s16, 0
      %p94 = por %p92, %p93
      %s95 = ssub.s32 %s17, %s36
      %p96 = scmp.eq.s32.totalorder %s95, 0
      %s98 = sadd.s32 %s97, 1
      %s99 = scalar_select %p96, %s97, %s98
      %p102 = pneg %p96
      %p103 = scmp.eq.s32.totalorder %s10, 3
      %p104 = por %p102, %p103
      %p105 = scmp.ne.s32.totalorder %s97, %s100
      %p106 = scmp.eq.s32.totalorder %s10, 0
      %p107 = por %p105, %p106
      %p108 = scmp.ne.s32.totalorder %s97, %s100
      %p109 = scmp.eq.s32.totalorder %s15, 3
      %p110 = por %p108, %p109
      %p111 = scmp.ne.s32.totalorder %s100, %s101
      %p112 = scmp.eq.s32.totalorder %s15, 0
      %p113 = por %p111, %p112
      %p114 = scmp.ne.s32.totalorder %s100, %s101
      %p115 = scmp.eq.s32.totalorder %s16, 3
      %p116 = por %p114, %p115
      %p118 = scmp.ne.s32.totalorder %s101, %s117
      %p119 = scmp.eq.s32.totalorder %s16, 0
      %p120 = por %p118, %p119
      %s121 = ssub.s32 %s17, %s36
      %p122 = scmp.eq.s32.totalorder %s121, 0
      %s124 = sadd.s32 %s123, 1
      %s125 = scalar_select %p122, %s123, %s124
      %p128 = pneg %p122
      %p129 = scmp.eq.s32.totalorder %s10, 3
      %p130 = por %p128, %p129
      %p131 = scmp.ne.s32.totalorder %s123, %s126
      %p132 = scmp.eq.s32.totalorder %s10, 0
      %p133 = por %p131, %p132
      %p134 = scmp.ne.s32.totalorder %s123, %s126
      %p135 = scmp.eq.s32.totalorder %s15, 3
      %p136 = por %p134, %p135
      %p137 = scmp.ne.s32.totalorder %s126, %s127
      %p138 = scmp.eq.s32.totalorder %s15, 0
      %p139 = por %p137, %p138
      %p140 = scmp.ne.s32.totalorder %s126, %s127
      %p141 = scmp.eq.s32.totalorder %s16, 3
      %p142 = por %p140, %p141
      %p144 = scmp.ne.s32.totalorder %s127, %s143
      %p145 = scmp.eq.s32.totalorder %s16, 0
      %p146 = por %p144, %p145
      %p147 = scmp.le.s32.totalorder 1, %s10
      %p148 = scmp.lt.s32.totalorder %s10, 5
      %p149 = pnand %p147, %p148
      %p150 = pneg %p149
      // Predicated region
      $region9: #{tpu_custom_call.1} parent=5 // pred_check
        _
      $region10: #{tpu_custom_call.1} parent=5 // pred_check_branch
        %152 = sbr.rel (%p149) target = $region12
      $region11: #{tpu_custom_call.1} parent=5 // pred_region
        %s153 = ssub.s32 %s10, 1
        // Predicated region
        $region13: #{tpu_custom_call.1} parent=11 // pred_check
          %p154 = pneg %p113
        $region14: #{tpu_custom_call.1} parent=11 // pred_check_branch
          %156 = sbr.rel (%p154) target = $region16
        $region15: #{tpu_custom_call.1} parent=11 // pred_region
          %p157 = scmp.lt.s32.totalorder %s20, 0
          %s158 = scalar_select %p157, %s20, 0
          %s159 = smul.addr %s158, 2
          %s160 = scalar_lea.vmem %s2, %s159
        $region16: #{tpu_custom_call.1} parent=11 // pred_fallthru
          _
      $region12: #{tpu_custom_call.1} parent=5 // pred_fallthru
        _
      %p161 = scmp.lt.s32.totalorder %s10, 4
      // Predicated region
      $region17: #{tpu_custom_call.1} parent=5 // pred_check
        %p162 = pneg %p161
      $region18: #{tpu_custom_call.1} parent=5 // pred_check_branch
        %164 = sbr.rel (%p162) target = $region20
      $region19: #{tpu_custom_call.1} parent=5 // pred_region
        // Predicated region
        $region21: #{tpu_custom_call.1} parent=19 // pred_check
          %p165 = pneg %p53
        $region22: #{tpu_custom_call.1} parent=19 // pred_check_branch
          %167 = sbr.rel (%p165) target = $region24
        $region23: #{tpu_custom_call.1} parent=19 // pred_region
          %s168 = smul.u32 4, %s19
          %p169 = scmp.lt.s32.totalorder %s18, 3
          %s170 = scalar_select %p169, %s18, 3
          %p171 = scmp.lt.s32.totalorder %s168, 3
          %s172 = scalar_select %p171, %s168, 3
          %p173 = scmp.lt.s32.totalorder %s17, 0
          %s174 = scalar_select %p173, %s17, 0
          %s175 = sadd.s32 %s174, %s172
          %s176 = smul.addr %s170, 8
          %s177 = sadd.s32 %s175, %s176
          %s178 = smul.addr %s177, 8
          %s179 = scalar_lea.vmem %s0, %s178
          %s180 = smul.u32 4, %s19
        $region24: #{tpu_custom_call.1} parent=19 // pred_fallthru
          _
        // Predicated region
        $region25: #{tpu_custom_call.1} parent=19 // pred_check
          %p181 = pneg %p81
        $region26: #{tpu_custom_call.1} parent=19 // pred_check_branch
          %183 = sbr.rel (%p181) target = $region28
        $region27: #{tpu_custom_call.1} parent=19 // pred_region
          %p184 = scmp.lt.s32.totalorder %s18, 3
          %s185 = scalar_select %p184, %s18, 3
          %p186 = scmp.lt.s32.totalorder %s17, 0
          %s187 = scalar_select %p186, %s17, 0
          %s188 = sadd.s32 %s187, %s185
          %s189 = smul.addr %s188, 2
          %s190 = scalar_lea.vmem %s1, %s189
        $region28: #{tpu_custom_call.1} parent=19 // pred_fallthru
          _
      $region20: #{tpu_custom_call.1} parent=5 // pred_fallthru
        _
      %p191 = scmp.le.s32.totalorder 1, %s10
      %p192 = scmp.lt.s32.totalorder %s10, 5
      %p193 = pnand %p191, %p192
      %p194 = pneg %p193
      // Predicated region
      $region29: #{tpu_custom_call.1} parent=5 // pred_check
        _
      $region30: #{tpu_custom_call.1} parent=5 // pred_check_branch
        %196 = sbr.rel (%p193) target = $region32
      $region31: #{tpu_custom_call.1} parent=5 // pred_region
        %s197 = ssub.s32 %s10, 1
        %s198 = smul.u32 4, %s22
        %p199 = scmp.lt.s32.totalorder %s21, 3
        %s200 = scalar_select %p199, %s21, 3
        %p201 = scmp.lt.s32.totalorder %s198, 3
        %s202 = scalar_select %p201, %s198, 3
        %p203 = scmp.lt.s32.totalorder %s20, 0
        %s204 = scalar_select %p203, %s20, 0
        %s205 = sadd.s32 %s204, %s202
        %s206 = smul.addr %s200, 8
        %s207 = sadd.s32 %s205, %s206
        %s208 = smul.addr %s207, 8
        %s209 = scalar_lea.vmem %s0, %s208
        %p210 = pneg %p59
        %p211 = pneg %p56
        %p212 = scmp.lt.s32.totalorder %s21, 3
        %s213 = scalar_select %p212, %s21, 3
        %p214 = scmp.lt.s32.totalorder %s20, 0
        %s215 = scalar_select %p214, %s20, 0
        %s216 = sadd.s32 %s215, %s213
        %s217 = smul.addr %s216, 2
        %s218 = scalar_lea.vmem %s1, %s217
        %p219 = pneg %p87
        %p220 = pneg %p84
        %p221 = scmp.lt.s32.totalorder %s20, 0
        %s222 = scalar_select %p221, %s20, 0
        %s223 = smul.addr %s222, 2
        %s224 = scalar_lea.vmem %s2, %s223
        %p225 = pneg %p113
        %p226 = pneg %p110
        %p227 = pneg %p139
        %p228 = pneg %p136
        %s229 = smul.u32 4, %s22
        %p230 = scmp.lt.s32.totalorder %s21, 3
        %s231 = scalar_select %p230, %s21, 3
        %p232 = scmp.lt.s32.totalorder %s229, 3
        %s233 = scalar_select %p232, %s229, 3
        %p234 = scmp.lt.s32.totalorder %s20, 0
        %s235 = scalar_select %p234, %s20, 0
        %s236 = sadd.s32 %s235, %s233
        %s237 = smul.addr %s231, 8
        %s238 = sadd.s32 %s236, %s237
        %s239 = smul.addr %s238, 8
        %s240 = scalar_lea.vmem %s0, %s239
        %s241 = smul.u32 4, %s22
        %p242 = scmp.lt.s32.totalorder %s21, 3
        %s243 = scalar_select %p242, %s21, 3
        %p244 = scmp.lt.s32.totalorder %s20, 0
        %s245 = scalar_select %p244, %s20, 0
        %s246 = sadd.s32 %s245, %s243
        %s247 = smul.addr %s246, 2
        %s248 = scalar_lea.vmem %s1, %s247
        %p249 = scmp.lt.s32.totalorder %s20, 0
        %s250 = scalar_select %p249, %s20, 0
        %s251 = smul.addr %s250, 2
        %s252 = scalar_lea.vmem %s2, %s251
        %p253 = scmp.eq.s32.totalorder %s21, 0
        %p254 = scmp.eq.s32.totalorder %s22, 0
        %p255 = pnand %p253, %p254
        %p256 = pneg %p255
        // Predicated region
        $region33: #{tpu_custom_call.1} parent=31 // pred_check
          _
        $region34: #{tpu_custom_call.1} parent=31 // pred_check_branch
          %258 = sbr.rel (%p255) target = $region36
        $region35: #{tpu_custom_call.1} parent=31 // pred_region
          %vm259 = vcmask 58368
          %260 = vst.msk [vmem:[#allocation5] sm:$0x3] %vm259, 0.0
        $region36: #{tpu_custom_call.1} parent=31 // pred_fallthru
          _
        // Predicated region
        $region37: #{tpu_custom_call.1} parent=31 // pred_check
          %p261 = pneg %p254
        $region38: #{tpu_custom_call.1} parent=31 // pred_check_branch
          %263 = sbr.rel (%p261) target = $region40
        $region39: #{tpu_custom_call.1} parent=31 // pred_region
          %vm264 = vcmask 58368
          %265 = vst.msk [vmem:[#allocation2] sm:$0x3] %vm264, -inf
          %266 = vst.msk [vmem:[#allocation3] sm:$0x3] %vm264, 0.0
          %267 = vst.msk [vmem:[#allocation4] sm:$0x3] %vm264, 0.0
        $region40: #{tpu_custom_call.1} parent=31 // pred_fallthru
          _
        %v268 = vld [vmem:[%s240] sm:$0xff]
        %v269 = vld [vmem:[%s240 + $0x8] sm:$0xff]
        %v270 = vld [vmem:[%s240 + $0x10] sm:$0xff]
        %v271 = vld [vmem:[%s240 + $0x18] sm:$0xff]
        %v272 = vld [vmem:[%s240 + $0x20] sm:$0xff]
        %v273 = vld [vmem:[%s240 + $0x28] sm:$0xff]
        %v274 = vld [vmem:[%s240 + $0x30] sm:$0xff]
        %v275 = vld [vmem:[%s240 + $0x38] sm:$0xff]
        %vm276 = vcmask 64512
        %v277 = vsel %vm276, %v268, -inf
        %v278 = vsel %vm276, %v269, -inf
        %v279 = vsel %vm276, %v270, -inf
        %v280 = vmax.f32 %v277, %v279
        %v281 = vsel %vm276, %v271, -inf
        %v282 = vmax.f32 %v278, %v281
        %v283 = vmax.f32 %v280, %v282
        %v284 = vrot.slane %v283, 4
        %v285 = vmax.f32 %v283, %v284
        %v286 = vrot.slane %v285, 2
        %v287 = vmax.f32 %v285, %v286
        %v288 = vrot.slane %v287, 1
        %v289 = vmax.f32 %v287, %v288
        %v290 = vsel %vm276, %v272, -inf
        %v291 = vsel %vm276, %v273, -inf
        %v292 = vsel %vm276, %v274, -inf
        %v293 = vmax.f32 %v290, %v292
        %v294 = vsel %vm276, %v275, -inf
        %v295 = vmax.f32 %v291, %v294
        %v296 = vmax.f32 %v293, %v295
        %v297 = vrot.slane %v296, 4
        %v298 = vmax.f32 %v296, %v297
        %v299 = vrot.slane %v298, 2
        %v300 = vmax.f32 %v298, %v299
        %v301 = vrot.slane %v300, 1
        %v302 = vmax.f32 %v300, %v301
        %v303 = vld [vmem:[#allocation2] sm:$0x3]
        %vm306 = vcmask 1041409
        %v307 = vsel %vm306, %v302, %v289
        %v309 = vmax.f32 %v303, %v307
        %v312 = vunpack.c.l.s4 1966171168
        %v313 = vunpack.c.0.s8 %v312
        %v314 = vlaneseq
        %v315 = vshrl.u32 %v314, 7
        %v316 = vsub.s32 %v313, %v315
        %v317 = vrot.slane %v309, %v316
        %v318 = vcombine.high %v317, %v317
        %v320 = vunpack.c.l.s4 1966171168
        %v321 = vunpack.c.0.s8 %v320
        %v322 = vlaneseq
        %v323 = vshrl.u32 %v322, 7
        %v324 = vsub.s32 %v321, %v323
        %v325 = vrot.slane %v317, %v324
        %v327 = vunpack.c.l.s4 1966171168
        %v328 = vunpack.c.0.s8 %v327
        %v329 = vlaneseq
        %v330 = vshrl.u32 %v329, 7
        %v331 = vsub.s32 %v328, %v330
        %v332 = vrot.slane %v318, %v331
        %v333 = vlaneseq
        %v334 = vshrl.u32 %v333, 7
        %v335 = vsub.s32 0, %v334
        %v336 = vrot.slane %v325, %v335
        %v337 = vlaneseq
        %v338 = vshrl.u32 %v337, 7
        %v339 = vsub.s32 0, %v338
        %v340 = vrot.slane %v332, %v339
        %v343 = vsub.f32 %v268, %v336
        %v344 = vsub.f32 %v269, %v336
        %v345 = vsub.f32 %v270, %v336
        %v346 = vsub.f32 %v271, %v336
        %v347 = vsub.f32 %v272, %v340
        %v348 = vsub.f32 %v273, %v340
        %v349 = vsub.f32 %v274, %v340
        %v350 = vsub.f32 %v275, %v340
        %v351 = vmul.f32 %v343, 1.442695
        %v352 = vpow.pop %v351
        %v353 = vmul.f32 %v344, 1.442695
        %v354 = vpow.pop %v353
        %v355 = vmul.f32 %v345, 1.442695
        %v356 = vpow.pop %v355
        %v357 = vmul.f32 %v346, 1.442695
        %v358 = vpow.pop %v357
        %v359 = vmul.f32 %v347, 1.442695
        %v360 = vpow.pop %v359
        %v361 = vmul.f32 %v348, 1.442695
        %v362 = vpow.pop %v361
        %v363 = vmul.f32 %v349, 1.442695
        %v364 = vpow.pop %v363
        %v365 = vmul.f32 %v350, 1.442695
        %v366 = vpow.pop %v365
        %v367 = vsel %vm276, %v352, 0.0
        %v368 = vsel %vm276, %v354, 0.0
        %v369 = vadd.f32 %v367, %v368
        %v370 = vsel %vm276, %v356, 0.0
        %v371 = vadd.f32 %v369, %v370
        %v372 = vsel %vm276, %v358, 0.0
        %v373 = vadd.f32 %v371, %v372
        %v374 = vrot.slane %v373, 4
        %v375 = vadd.f32 %v373, %v374
        %v376 = vrot.slane %v375, 2
        %v377 = vadd.f32 %v375, %v376
        %v378 = vrot.slane %v377, 1
        %v379 = vadd.f32 %v377, %v378
        %v380 = vsel %vm276, %v360, 0.0
        %v381 = vsel %vm276, %v362, 0.0
        %v382 = vadd.f32 %v380, %v381
        %v383 = vsel %vm276, %v364, 0.0
        %v384 = vadd.f32 %v382, %v383
        %v385 = vsel %vm276, %v366, 0.0
        %v386 = vadd.f32 %v384, %v385
        %v387 = vrot.slane %v386, 4
        %v388 = vadd.f32 %v386, %v387
        %v389 = vrot.slane %v388, 2
        %v390 = vadd.f32 %v388, %v389
        %v391 = vrot.slane %v390, 1
        %v392 = vadd.f32 %v390, %v391
        %v393 = vld [vmem:[#allocation3] sm:$0x3]
        %v394 = vsub.f32 %v303, %v309
        %v395 = vmul.f32 %v394, 1.442695
        %v396 = vpow.pop %v395
        %v397 = vmul.f32 %v393, %v396
        %v400 = vsel %vm306, %v392, %v379
        %v402 = vadd.f32 %v397, %v400
        %vm403 = vcmask 58368
        %404 = vst.msk [vmem:[#allocation3] sm:$0x3] %vm403, %v402
        %405 = vst.msk [vmem:[#allocation2] sm:$0x3] %vm403, %v309
        %v406 = vld [vmem:[%s248] sm:$0x3]
        %s407 = smul.u32 %s22, 32
        %v408 = vlaneseq
        %v409 = vshrl.u32 %v408, 7
        %v410 = vadd.s32 %v409, 8
        %v411 = vadd.s32 %v409, 16
        %v412 = vadd.s32 %v409, 24
        %v413 = vstv %s407
        %v414 = vadd.s32 %v413, %v409
        %v415 = vadd.s32 %v413, %v410
        %v416 = vadd.s32 %v413, %v411
        %v417 = vadd.s32 %v413, %v412
        %v419 = vunpack.c.l.s4 1966171168
        %v420 = vunpack.c.0.s8 %v419
        %v421 = vlaneseq
        %v422 = vshrl.u32 %v421, 7
        %v423 = vsub.s32 %v420, %v422
        %v424 = vrot.slane %v406, %v423
        %v425 = vcombine.high %v424, %v424
        %v427 = vunpack.c.l.s4 1966171168
        %v428 = vunpack.c.0.s8 %v427
        %v429 = vlaneseq
        %v430 = vshrl.u32 %v429, 7
        %v431 = vsub.s32 %v428, %v430
        %v432 = vrot.slane %v424, %v431
        %v434 = vunpack.c.l.s4 1966171168
        %v435 = vunpack.c.0.s8 %v434
        %v436 = vlaneseq
        %v437 = vshrl.u32 %v436, 7
        %v438 = vsub.s32 %v435, %v437
        %v439 = vrot.slane %v425, %v438
        %v440 = vlaneseq
        %v441 = vshrl.u32 %v440, 7
        %v442 = vsub.s32 0, %v441
        %v443 = vrot.slane %v432, %v442
        %v444 = vlaneseq
        %v445 = vshrl.u32 %v444, 7
        %v446 = vsub.s32 0, %v445
        %v447 = vrot.slane %v439, %v446
        %vm448 = vcmp.eq.s32.totalorder %v414, %v443
        %vm449 = vcmp.eq.s32.totalorder %v415, %v443
        %vm450 = vcmp.eq.s32.totalorder %v416, %v443
        %vm451 = vcmp.eq.s32.totalorder %v417, %v443
        %vm452 = vcmp.eq.s32.totalorder %v414, %v447
        %vm453 = vcmp.eq.s32.totalorder %v415, %v447
        %vm454 = vcmp.eq.s32.totalorder %v416, %v447
        %vm455 = vcmp.eq.s32.totalorder %v417, %v447
        %v456 = vld [vmem:[#allocation4] sm:$0x3]
        %v457 = vsel %vm448, %v268, 0.0
        %v458 = vsel %vm449, %v269, 0.0
        %v459 = vsel %vm450, %v270, 0.0
        %v460 = vsel %vm451, %v271, 0.0
        %v461 = vsel %vm452, %v272, 0.0
        %v462 = vsel %vm453, %v273, 0.0
        %v463 = vsel %vm454, %v274, 0.0
        %v464 = vsel %vm455, %v275, 0.0
        %v465 = vsel %vm276, %v457, 0.0
        %v466 = vsel %vm276, %v458, 0.0
        %v467 = vadd.f32 %v465, %v466
        %v468 = vsel %vm276, %v459, 0.0
        %v469 = vadd.f32 %v467, %v468
        %v470 = vsel %vm276, %v460, 0.0
        %v471 = vadd.f32 %v469, %v470
        %v472 = vrot.slane %v471, 4
        %v473 = vadd.f32 %v471, %v472
        %v474 = vrot.slane %v473, 2
        %v475 = vadd.f32 %v473, %v474
        %v476 = vrot.slane %v475, 1
        %v477 = vadd.f32 %v475, %v476
        %v478 = vsel %vm276, %v461, 0.0
        %v479 = vsel %vm276, %v462, 0.0
        %v480 = vadd.f32 %v478, %v479
        %v481 = vsel %vm276, %v463, 0.0
        %v482 = vadd.f32 %v480, %v481
        %v483 = vsel %vm276, %v464, 0.0
        %v484 = vadd.f32 %v482, %v483
        %v485 = vrot.slane %v484, 4
        %v486 = vadd.f32 %v484, %v485
        %v487 = vrot.slane %v486, 2
        %v488 = vadd.f32 %v486, %v487
        %v489 = vrot.slane %v488, 1
        %v490 = vadd.f32 %v488, %v489
        %v493 = vsel %vm306, %v490, %v477
        %v495 = vadd.f32 %v456, %v493
        %496 = vst.msk [vmem:[#allocation4] sm:$0x3] %vm403, %v495
        // Predicated region
        $region41: #{tpu_custom_call.1} parent=31 // pred_check
          %p497 = pneg %p254
        $region42: #{tpu_custom_call.1} parent=31 // pred_check_branch
          %499 = sbr.rel (%p497) target = $region44
        $region43: #{tpu_custom_call.1} parent=31 // pred_region
          %v500 = vld [vmem:[#allocation5] sm:$0x3]
          %v501 = vld [vmem:[#allocation3] sm:$0x3]
          %v502 = vlog2.pop %v501
          %v503 = vmul.f32 %v502, 0.6931472
          %v504 = vld [vmem:[#allocation2] sm:$0x3]
          %v505 = vadd.f32 %v503, %v504
          %v506 = vld [vmem:[#allocation4] sm:$0x3]
          %v507 = vsub.f32 %v505, %v506
          %v508 = vadd.f32 %v500, %v507
          %509 = vst.msk [vmem:[#allocation5] sm:$0x3] %vm403, %v508
        $region44: #{tpu_custom_call.1} parent=31 // pred_fallthru
          _
        %p510 = scmp.eq.s32.totalorder %s21, 3
        %p511 = pnand %p510, %p254
        %p512 = pneg %p511
        // Predicated region
        $region45: #{tpu_custom_call.1} parent=31 // pred_check
          _
        $region46: #{tpu_custom_call.1} parent=31 // pred_check_branch
          %514 = sbr.rel (%p511) target = $region48
        $region47: #{tpu_custom_call.1} parent=31 // pred_region
          %v515 = vld [vmem:[#allocation5] sm:$0x3]
          %v516 = vld [vmem:[%s252] sm:$0x3]
          %v517 = vmul.f32 %v515, %v516
          %v518 = vsel %vm403, %v517, 0.0
          %v519 = vrot.slane %v518, 4
          %v520 = vadd.f32 %v518, %v519
          %v521 = vrot.slane %v520, 2
          %v522 = vadd.f32 %v520, %v521
          %v523 = vrot.slane %v522, 1
          %v524 = vadd.f32 %v522, %v523
          %vm525 = vcmask 57344
          %526 = vst.msk [vmem:[#allocation6] sm:$0x1] %vm525, %v524
        $region48: #{tpu_custom_call.1} parent=31 // pred_fallthru
          _
        // Predicated region
        $region49: #{tpu_custom_call.1} parent=31 // pred_check
          %p527 = pneg %p136
        $region50: #{tpu_custom_call.1} parent=31 // pred_check_branch
          %529 = sbr.rel (%p527) target = $region52
        $region51: #{tpu_custom_call.1} parent=31 // pred_region
          %s531 = ssub.s32 16, 16
          %532 = vsyncadd [#allocation7], %s531
          %s533 = smul.addr %s20, 16
          %s534 = scalar_lea.hbm %s3, %s533
          %s536 = sshll.u32 [#allocation6], 4
          %s537 = int_to_ptr.vmem [resolvable:$true] %s536
          %539 = dma.vmem_to_hbm [thread:$0]  %s537, 16, %s534, [#allocation7]
        $region52: #{tpu_custom_call.1} parent=31 // pred_fallthru
          _
        // Predicated region
        $region53: #{tpu_custom_call.1} parent=31 // pred_check
          %p540 = pneg %p136
        $region54: #{tpu_custom_call.1} parent=31 // pred_check_branch
          %542 = sbr.rel (%p540) target = $region56
        $region55: #{tpu_custom_call.1} parent=31 // pred_region
          %543 = dma.done [#allocation7], 16
        $region56: #{tpu_custom_call.1} parent=31 // pred_fallthru
          _
      $region32: #{tpu_custom_call.1} parent=5 // pred_fallthru
        _
      %p544 = scmp.le.s32.totalorder 2, %s10
      // Predicated region
      $region57: #{tpu_custom_call.1} parent=5 // pred_check
        %p545 = pneg %p544
      $region58: #{tpu_custom_call.1} parent=5 // pred_check_branch
        %547 = sbr.rel (%p545) target = $region60
      $region59: #{tpu_custom_call.1} parent=5 // pred_region
        %s548 = ssub.s32 %s10, 2
      $region60: #{tpu_custom_call.1} parent=5 // pred_fallthru
        _
    $region6: #{tpu_custom_call.1} parent=1 // loop_footer
      %s14 = sadd.s32 1, %s10
    $region7: #{tpu_custom_call.1} parent=1 // loop_footer_branch
      %9 = sbr.rel target = $region3
    $region8: #{tpu_custom_call.1} parent=1 // loop_exit
      _
    %549 = vsyncpa [#allocation7], 1
    %s550 = scalar_lea.sflag [#allocation7], 1
    %551 = vsyncpa %s550, 1

</llo_original>
